<compile_context>
chip_gen: v7x
topology: tpu7x:2x2x1
jax: 0.10.0
libtpu: 0.0.40
codegen_flags: <defaults>
</compile_context>

<pallas_src>
import functools

import jax
import jax.numpy as jnp
from jax.experimental import pallas as pl
from jax.experimental.pallas import tpu as pltpu


def _adain_kernel(x_ref, fb_ref, o_ref, *, inv_n):
    # x_ref  : (TR, HW)  rows are (b, c) pairs, lanes are flattened spatial
    # fb_ref : (TR, 2)   column 0 = factor, column 1 = bias (from style Linear)
    # o_ref  : (TR, HW)
    x = x_ref[...].astype(jnp.float32)

    # One-pass biased variance.  Exact because the block's last dim is the full
    # spatial extent (no zero-padded lanes enter the sums).  The clamp guards
    # catastrophic cancellation for large-mean inputs.
    s1 = jnp.sum(x, axis=-1, keepdims=True)                    # (TR, 1)
    s2 = jnp.sum(x * x, axis=-1, keepdims=True)                # (TR, 1)
    mean = s1 * inv_n
    var = jnp.maximum(s2 * inv_n - mean * mean, 0.0)

    fb = fb_ref[...].astype(jnp.float32)                       # (TR, 2)
    factor = fb[:, 0:1]
    bias = fb[:, 1:2]

    # Fused instance-norm + AdaIn modulation: one affine per row, one store.
    scale = factor * jax.lax.rsqrt(var + 1e-5)                 # (TR, 1)
    shift = bias - mean * scale                                # (TR, 1)
    o_ref[...] = (x * scale + shift).astype(o_ref.dtype)


def adain(content, style, weight, lin_bias):
    """content: (B, C, H, W); style: (B, dim); weight: (dim, 2C); lin_bias: (2C,).

    `weight` is the transpose of the torch nn.Linear weight (which is (2C, dim)).
    """
    B, C, H, W = content.shape
    HW = H * W
    N = B * C

    # --- style transform hoisted out of the kernel (tiny M=B matmul, f32) ---
    sb = (style.astype(jnp.float32) @ weight.astype(jnp.float32)
          + lin_bias.astype(jnp.float32))                                # (B, 2C)
    # Merge factor/bias into one (N, 2) table -> a single small DMA per step.
    fb = jnp.stack([sb[:, :C].reshape(-1), sb[:, C:].reshape(-1)], axis=-1)

    # Rows are (b, c) pairs, lanes are flattened spatial.  No HBM-level padding
    # or output slicing: reshape of a contiguous array is free.
    x = content.reshape(N, HW)

    # --- VMEM budget, sized from the f32 compute dtype -----------------------
    try:
        vmem_cap = int(pltpu.get_tpu_info().vmem_capacity_bytes)
    except Exception:  # conservative fallback (v7x per-core VMEM)
        vmem_cap = 64 * 1024 * 1024
    # ~0.75x physical, capped at 96 MiB: headroom for Mosaic scratch on v7x,
    # larger blocks on v5e/v6e (128 MiB VMEM).
    vmem_limit = max(32 * 1024 * 1024, min((vmem_cap * 3) // 4, 96 * 1024 * 1024))

    itemsize = jnp.dtype(content.dtype).itemsize
    # Live bytes per block row per step: double-buffered native in + out (4x)
    # plus the in-kernel f32 working copy and ~one f32 temporary (8 B/elem).
    row_live_bytes = 4 * HW * itemsize + 8 * HW
    if 8 * row_live_bytes > vmem_limit:
        # TODO(synk): spatial grid-tiling with a two-pass reduction for huge H*W.
        raise NotImplementedError(f"H*W={HW} too large for a single row-block in VMEM")

    budget = vmem_limit // 2                      # keep blocks <= ~half the limit
    max_tr = min(2048, max(8, (budget // row_live_bytes) // 8 * 8))

    if N <= 8:
        TR = N                                    # full-extent block (exempt from 8-rule)
    else:
        # Ensure >= 2 grid steps so both v7x TensorCores get work.
        half = (((N + 1) // 2) + 7) // 8 * 8
        TR = max(8, min(max_tr, half))
    grid = pl.cdiv(N, TR)

    kernel = functools.partial(_adain_kernel, inv_n=float(1.0 / HW))

    out = pl.pallas_call(
        kernel,
        out_shape=jax.ShapeDtypeStruct((N, HW), content.dtype),
        grid_spec=pltpu.PrefetchScalarGridSpec(
            num_scalar_prefetch=0,
            grid=(grid,),
            in_specs=[
                pl.BlockSpec((TR, HW), lambda i: (i, 0)),   # content rows
                pl.BlockSpec((TR, 2), lambda i: (i, 0)),    # factor/bias rows
            ],
            out_specs=pl.BlockSpec((TR, HW), lambda i: (i, 0)),
        ),
        compiler_params=pltpu.CompilerParams(
            dimension_semantics=("parallel",),
            vmem_limit_bytes=int(vmem_limit),
        ),
    )(x, fb)

    return out.reshape(B, C, H, W)


def _reference(content, style, weight, lin_bias):
    # Pure-JAX reference mirroring the PyTorch forward.
    C = content.shape[1]
    sb = style @ weight + lin_bias                                      # (B, 2C)
    factor = sb[:, :C][:, :, None, None]
    bias = sb[:, C:][:, :, None, None]
    mean = jnp.mean(content, axis=(2, 3), keepdims=True)
    var = jnp.mean((content - mean) ** 2, axis=(2, 3), keepdims=True)
    return (content - mean) * jax.lax.rsqrt(var + 1e-5) * factor + bias


if __name__ == "__main__":
    key = jax.random.PRNGKey(0)

    # Primary shape: B=2, C=4, 16x16, style dim=8.
    B, C, H, W, DIM = 2, 4, 16, 16, 8
    k1, k2, k3, k4, key = jax.random.split(key, 5)
    content = jax.random.normal(k1, (B, C, H, W), dtype=jnp.float32)
    style = jax.random.normal(k2, (B, DIM), dtype=jnp.float32)
    bound = 1.0 / float(DIM) ** 0.5
    weight = jax.random.uniform(k3, (DIM, 2 * C), jnp.float32, -bound, bound)
    lin_bias = jax.random.uniform(k4, (2 * C,), jnp.float32, -bound, bound)

    out = jax.block_until_ready(adain(content, style, weight, lin_bias))
    ref = _reference(content, style, weight, lin_bias)
    assert out.shape == (B, C, H, W)
    assert jnp.allclose(out, ref, atol=1e-3, rtol=1e-3), "mismatch vs reference"

    # Ragged shape: N=12 not a multiple of the 8-row tile, HW=255 not a multiple
    # of 128 — exercises boundary-masked row blocks and masked lane stores.
    B2, C2, H2, W2 = 3, 4, 15, 17
    k1, k2, k3, k4, key = jax.random.split(key, 5)
    content2 = jax.random.normal(k1, (B2, C2, H2, W2), dtype=jnp.float32)
    style2 = jax.random.normal(k2, (B2, DIM), dtype=jnp.float32)
    weight2 = jax.random.uniform(k3, (DIM, 2 * C2), jnp.float32, -bound, bound)
    lin_bias2 = jax.random.uniform(k4, (2 * C2,), jnp.float32, -bound, bound)

    out2 = jax.block_until_ready(adain(content2, style2, weight2, lin_bias2))
    ref2 = _reference(content2, style2, weight2, lin_bias2)
    assert out2.shape == (B2, C2, H2, W2)
    assert jnp.allclose(out2, ref2, atol=1e-3, rtol=1e-3), "mismatch vs reference (ragged)"

    print("KERNEL_OK")
</pallas_src>

<mosaic_0001>
module attributes {stable_mosaic.version = 11 : i64} {
  func.func @_adain_kernel(%arg0: i32, %arg1: memref<8x256xf32, #tpu.memory_space<vmem>>, %arg2: memref<8x2xf32, #tpu.memory_space<vmem>>, %arg3: memref<8x256xf32, #tpu.memory_space<vmem>>) attributes {dimension_semantics = [#tpu.dimension_semantics<parallel>], iteration_bounds = array<i64: 1>, scalar_prefetch = 0 : i64, scratch_operands = 0 : i64, tpu.core_type = #tpu.core_type<tc>, window_params = [{transform_indices = @transform_0, window_bounds = array<i64: 8, 256>}, {transform_indices = @transform_1, window_bounds = array<i64: 8, 2>}, {transform_indices = @transform_2, window_bounds = array<i64: 8, 256>}]} {
    %c0 = arith.constant 0 : index
    %c0_0 = arith.constant 0 : index
    %0 = vector.load %arg1[%c0, %c0_0] : memref<8x256xf32, #tpu.memory_space<vmem>>, vector<8x256xf32>
    %cst = arith.constant dense<0.000000e+00> : vector<8xf32>
    %1 = vector.multi_reduction <add>, %0, %cst [1] : vector<8x256xf32> to vector<8xf32>
    %2 = vector.shape_cast %1 : vector<8xf32> to vector<8x1xf32>
    %3 = arith.mulf %0, %0 : vector<8x256xf32>
    %cst_1 = arith.constant dense<0.000000e+00> : vector<8xf32>
    %4 = vector.multi_reduction <add>, %3, %cst_1 [1] : vector<8x256xf32> to vector<8xf32>
    %5 = vector.shape_cast %4 : vector<8xf32> to vector<8x1xf32>
    %cst_2 = arith.constant 3.906250e-03 : f32
    %6 = vector.broadcast %cst_2 : f32 to vector<8x1xf32>
    %7 = arith.mulf %2, %6 : vector<8x1xf32>
    %cst_3 = arith.constant 3.906250e-03 : f32
    %8 = vector.broadcast %cst_3 : f32 to vector<8x1xf32>
    %9 = arith.mulf %5, %8 : vector<8x1xf32>
    %10 = arith.mulf %7, %7 : vector<8x1xf32>
    %11 = arith.subf %9, %10 : vector<8x1xf32>
    %cst_4 = arith.constant 0.000000e+00 : f32
    %12 = vector.broadcast %cst_4 : f32 to vector<8x1xf32>
    %13 = arith.maximumf %11, %12 : vector<8x1xf32>
    %c0_5 = arith.constant 0 : index
    %c0_6 = arith.constant 0 : index
    %14 = vector.load %arg2[%c0_5, %c0_6] : memref<8x2xf32, #tpu.memory_space<vmem>>, vector<8x2xf32>
    %15 = vector.extract_strided_slice %14 {offsets = [0, 0], sizes = [8, 1], strides = [1, 1]} : vector<8x2xf32> to vector<8x1xf32>
    %16 = vector.extract_strided_slice %14 {offsets = [0, 1], sizes = [8, 1], strides = [1, 1]} : vector<8x2xf32> to vector<8x1xf32>
    %cst_7 = arith.constant 9.99999974E-6 : f32
    %17 = vector.broadcast %cst_7 : f32 to vector<8x1xf32>
    %18 = arith.addf %13, %17 : vector<8x1xf32>
    %19 = math.rsqrt %18 : vector<8x1xf32>
    %20 = arith.mulf %15, %19 : vector<8x1xf32>
    %21 = arith.mulf %7, %20 : vector<8x1xf32>
    %22 = arith.subf %16, %21 : vector<8x1xf32>
    %23 = vector.broadcast %20 : vector<8x1xf32> to vector<8x256xf32>
    %24 = arith.mulf %0, %23 : vector<8x256xf32>
    %25 = vector.broadcast %22 : vector<8x1xf32> to vector<8x256xf32>
    %26 = arith.addf %24, %25 : vector<8x256xf32>
    %c0_8 = arith.constant 0 : index
    %c0_9 = arith.constant 0 : index
    %27 = vector.load %arg3[%c0_8, %c0_9] : memref<8x256xf32, #tpu.memory_space<vmem>>, vector<8x256xf32>
    tpu.vector_store %arg3[%c0_8, %c0_9], %26 {strides = array<i32>} : memref<8x256xf32, #tpu.memory_space<vmem>>, vector<8x256xf32>,
    return
  }
  func.func @transform_0(%arg0: i32) -> (i32, i32) {
    %c0_i32 = arith.constant 0 : i32
    %c0_i32_0 = arith.constant 0 : i32
    return %arg0, %c0_i32 : i32, i32
  }
  func.func @transform_1(%arg0: i32) -> (i32, i32) {
    %c0_i32 = arith.constant 0 : i32
    %c0_i32_0 = arith.constant 0 : i32
    return %arg0, %c0_i32 : i32, i32
  }
  func.func @transform_2(%arg0: i32) -> (i32, i32) {
    %c0_i32 = arith.constant 0 : i32
    %c0_i32_0 = arith.constant 0 : i32
    return %arg0, %c0_i32 : i32, i32
  }
}

</mosaic_0001>

<llo_original>
// kernel: tpu_custom_call.1
$region0: #{tpu_custom_call.1}
  #allocation0 [shape = 'u32[]', space=smem, size = 0x4, offset = 0x4, fixed_abs, tag = 'smem constant byte address 0x4 - core index']
  #allocation1 [shape = 'u32[144,128]{1,0:T(1,128)}', space=vmem, size = 0x12000, scoped, tag = 'internal scratch']
  %s0 = inlined_call_operand.hbm [shape: f32[8,256], index: 0, kind: input, shape index: {}]
  %s1 = inlined_call_operand.vmem [shape: f32[8,2], index: 1, kind: input, shape index: {}]
  %s2 = inlined_call_operand.hbm [shape: f32[8,256], index: 2, kind: output, shape index: {}]
  %s3 = sld [smem:[#allocation0]]
  $region22: #{tpu_custom_call.1} parent=0
    _
  %s5 = ssub.s32 1, %s3
  %s6 = scalar_select 0, %s5, %s3
  $region1: #{tpu_custom_call.1} parent=0
    #allocation2 [shape = 'u8[8192]{0}', space=vmem, size = 0x2000, scoped, tag = 'input window, operand 0, single buffered']
    #allocation3 [shape = 's32[1]{0}', space=sflag, size = 0x4, scoped, tag = 'scoped memory for tpu_custom_call.1']
    #allocation4 [shape = 's32[1]{0}', space=sflag, size = 0x4, scoped, tag = 'scoped memory for tpu_custom_call.1']
    #allocation5 [shape = 'u8[8192]{0}', space=vmem, size = 0x2000, scoped, tag = 'output window, operand 0, single buffered']
    %7 = vsyncpa [#allocation3], 0
    %8 = vsyncpa [#allocation4], 0
    // Predicated region
    $region2: #{tpu_custom_call.1} parent=1 // pred_check
      _
    $region3: #{tpu_custom_call.1} parent=1 // pred_check_branch
      %10 = sbr.rel (0) target = $region5
    $region4: #{tpu_custom_call.1} parent=1 // pred_region
      %s12 = ssub.s32 256, 256
      %13 = vsyncadd [#allocation3], %s12
      %s15 = sshll.u32 [#allocation2], 4
      %s16 = int_to_ptr.vmem [resolvable:$true] %s15
      %18 = dma.hbm_to_vmem [thread:$0]  %s0, 256, %s16, [#allocation3]
    $region5: #{tpu_custom_call.1} parent=1 // pred_fallthru
      _
    // Predicated region
    $region6: #{tpu_custom_call.1} parent=1 // pred_check
      _
    $region7: #{tpu_custom_call.1} parent=1 // pred_check_branch
      %20 = sbr.rel (0) target = $region9
    $region8: #{tpu_custom_call.1} parent=1 // pred_region
      _
    $region9: #{tpu_custom_call.1} parent=1 // pred_fallthru
      _
    // Predicated region
    $region10: #{tpu_custom_call.1} parent=1 // pred_check
      _
    $region11: #{tpu_custom_call.1} parent=1 // pred_check_branch
      %22 = sbr.rel (0) target = $region13
    $region12: #{tpu_custom_call.1} parent=1 // pred_region
      %23 = dma.done [#allocation3], 256
    $region13: #{tpu_custom_call.1} parent=1 // pred_fallthru
      _
    %v24 = vld [vmem:[#allocation2] sm:$0xff]
    %v25 = vld [vmem:[#allocation2 + $0x8] sm:$0xff]
    %v26 = vadd.f32 %v24, %v25
    %27 = vadd.xlane.f32.xlu0 %v26
    %v28 = vpop.xlane.xlu0 %27
    %v29 = vmul.f32 %v24, %v24
    %v30 = vmul.f32 %v25, %v25
    %v31 = vadd.f32 %v29, %v30
    %32 = vadd.xlane.f32.xlu0 %v31
    %v33 = vpop.xlane.xlu0 %32
    %v34 = vmul.f32 %v28, 0.00390625
    %v35 = vmul.f32 %v33, 0.00390625
    %v36 = vmul.f32 %v34, %v34
    %v37 = vsub.f32 %v35, %v36
    %v38 = vmax.f32 %v37, 0.0
    %v39 = vld [vmem:[%s1] sm:$0xff]
    %v40 = vadd.f32 %v38, 1e-05
    %v41 = vrsqrt.pop %v40
    %v42 = vmul.f32 %v39, %v41
    %v43 = vmul.f32 %v34, %v42
    %45 = vrot.lane.b32.xlu0 %v43, 1
    %v46 = vpop.permute.xlu0 %45
    %v48 = vsub.f32 %v39, %v46
    %50 = vset.pattern.permute.xlu0 0
    %51 = vperm.xlu0 %50, %v42
    %v52 = vpop.permute.xlu0 %51
    %v54 = vmul.f32 %v24, %v52
    %v55 = vmul.f32 %v25, %v52
    %57 = vset.pattern.permute.xlu0 1
    %58 = vperm.xlu0 %57, %v48
    %v59 = vpop.permute.xlu0 %58
    %v61 = vadd.f32 %v54, %v59
    %v62 = vadd.f32 %v55, %v59
    %63 = vst [vmem:[#allocation5] sm:$0xff] %v61
    %64 = vst [vmem:[#allocation5 + $0x8] sm:$0xff] %v62
    // Predicated region
    $region14: #{tpu_custom_call.1} parent=1 // pred_check
      _
    $region15: #{tpu_custom_call.1} parent=1 // pred_check_branch
      %66 = sbr.rel (0) target = $region17
    $region16: #{tpu_custom_call.1} parent=1 // pred_region
      %s68 = ssub.s32 256, 256
      %69 = vsyncadd [#allocation4], %s68
      %s71 = sshll.u32 [#allocation5], 4
      %s72 = int_to_ptr.vmem [resolvable:$true] %s71
      %74 = dma.vmem_to_hbm [thread:$0]  %s72, 256, %s2, [#allocation4]
    $region17: #{tpu_custom_call.1} parent=1 // pred_fallthru
      _
    // Predicated region
    $region18: #{tpu_custom_call.1} parent=1 // pred_check
      _
    $region19: #{tpu_custom_call.1} parent=1 // pred_check_branch
      %76 = sbr.rel (0) target = $region21
    $region20: #{tpu_custom_call.1} parent=1 // pred_region
      %77 = dma.done [#allocation4], 256
    $region21: #{tpu_custom_call.1} parent=1 // pred_fallthru
      _
    %78 = vsyncpa [#allocation3], 1
    %79 = vsyncpa [#allocation4], 1

</llo_original>
